<compile_context>
chip_gen: v7x
topology: tpu7x:2x2x1
jax: 0.10.0
libtpu: 0.0.40
codegen_flags: <defaults>
</compile_context>

<pallas_src>
import jax
import jax.numpy as jnp
import numpy as np
from jax.experimental import pallas as pl
from jax.experimental.pallas import tpu as pltpu


def _round_up(n, m):
    return pl.cdiv(n, m) * m


# ----------------------------- Pallas kernel ------------------------------- #
def _givens_rotate_kernel(x_ref, r_ref, o_ref):
    # One MXU matmul: (row_tile, h_pad) @ (h_pad, h_pad), f32 accumulation.
    o_ref[...] = jnp.dot(
        x_ref[...], r_ref[...], preferred_element_type=jnp.float32
    ).astype(o_ref.dtype)


# ---------------------- rotation-matrix composition ------------------------- #
def _compose_rotation_matrix(thetas, h_dim):
    """R = G_0 @ G_1 @ ... @ G_{K-1}, so x @ R == ((x @ G_0) @ G_1) ... @ G_{K-1}."""
    num_rotations = int(thetas.shape[0])
    cos = jnp.cos(thetas.astype(jnp.float32))
    sin = jnp.sin(thetas.astype(jnp.float32))
    R = jnp.eye(h_dim, dtype=jnp.float32)
    for k in range(num_rotations):          # static loop; only 2 columns change
        i, j = k % h_dim, (k + 1) % h_dim
        ci, cj = R[:, i], R[:, j]
        # R <- R @ G_k  (G_k[i,i]=cos, G_k[i,j]=-sin, G_k[j,i]=sin, G_k[j,j]=cos)
        R = R.at[:, i].set(ci * cos[k] + cj * sin[k])
        R = R.at[:, j].set(cj * cos[k] - ci * sin[k])
    return R


# ------------------------------- wrapper ------------------------------------ #
def givens_rotations(x, thetas, *, row_block=512):
    if x.ndim != 4:
        raise ValueError(f"Expected input tensor to be 4D, but got {x.ndim}D")
    B, T, H, h = x.shape
    N = B * T * H

    R = _compose_rotation_matrix(thetas, h)

    # Fold batch/seq/head into rows; pad lanes (h) up to a multiple of 128 for
    # unmasked (lane-dense) stores, and pad rows up to the row tile.
    h_pad = int(_round_up(h, 128))
    rb = int(min(row_block, _round_up(N, 8)))
    n_pad = int(_round_up(N, rb))

    xf = x.reshape(N, h)
    xf = jnp.pad(xf, ((0, n_pad - N), (0, h_pad - h)))
    R_pad = jnp.eye(h_pad, dtype=jnp.float32).at[:h, :h].set(R).astype(x.dtype)

    out = pl.pallas_call(
        _givens_rotate_kernel,
        out_shape=jax.ShapeDtypeStruct((n_pad, h_pad), x.dtype),
        grid=(n_pad // rb,),
        in_specs=[
            pl.BlockSpec((rb, h_pad), lambda i: (i, 0)),      # x row tile
            pl.BlockSpec((h_pad, h_pad), lambda i: (0, 0)),   # composed rotation
        ],
        out_specs=pl.BlockSpec((rb, h_pad), lambda i: (i, 0)),
        compiler_params=pltpu.CompilerParams(
            dimension_semantics=("parallel",)),
    )(xf, R_pad)

    return out[:N, :h].reshape(B, T, H, h)


# --------------------------- pure-JAX reference ----------------------------- #
def reference(x, thetas):
    """Sequential per-rotation matmuls, exactly mirroring the torch module."""
    B, T, H, h = x.shape
    xf = x.reshape(-1, h).astype(jnp.float32)
    for k in range(int(thetas.shape[0])):
        i, j = k % h, (k + 1) % h
        G = jnp.eye(h, dtype=jnp.float32)
        G = G.at[i, i].set(jnp.cos(thetas[k]))
        G = G.at[i, j].set(-jnp.sin(thetas[k]))
        G = G.at[j, i].set(jnp.sin(thetas[k]))
        G = G.at[j, j].set(jnp.cos(thetas[k]))
        xf = xf @ G
    return xf.reshape(B, T, H, h).astype(x.dtype)


# --------------------------------- main -------------------------------------- #
if __name__ == "__main__":
    B, T, H, HD, K = 2, 8, 4, 32, 6       # batch, seq_len, n_head, h_dim, num_rotations
    key = jax.random.PRNGKey(0)
    kx, kt = jax.random.split(key)
    x = jax.random.normal(kx, (B, T, H, HD), jnp.float32)
    thetas = 0.3 * jax.random.normal(kt, (K,), jnp.float32)

    out = jax.block_until_ready(givens_rotations(x, thetas))
    ref = jax.block_until_ready(reference(x, thetas))
    np.testing.assert_allclose(np.asarray(out), np.asarray(ref),
                               rtol=1e-4, atol=1e-4)
    print("KERNEL_OK")
</pallas_src>

<mosaic_0001>
module attributes {stable_mosaic.version = 11 : i64} {
  func.func @_givens_rotate_kernel(%arg0: i32, %arg1: memref<64x128xf32, #tpu.memory_space<vmem>>, %arg2: memref<128x128xf32, #tpu.memory_space<vmem>>, %arg3: memref<64x128xf32, #tpu.memory_space<vmem>>) attributes {dimension_semantics = [#tpu.dimension_semantics<parallel>], iteration_bounds = array<i64: 1>, scalar_prefetch = 0 : i64, scratch_operands = 0 : i64, tpu.core_type = #tpu.core_type<tc>, window_params = [{transform_indices = @transform_0, window_bounds = array<i64: 64, 128>}, {pipeline_mode = #tpu.pipeline_mode<synchronous>, transform_indices = @transform_1, window_bounds = array<i64: 128, 128>}, {transform_indices = @transform_2, window_bounds = array<i64: 64, 128>}]} {
    %c0 = arith.constant 0 : index
    %c0_0 = arith.constant 0 : index
    %0 = vector.load %arg1[%c0, %c0_0] : memref<64x128xf32, #tpu.memory_space<vmem>>, vector<64x128xf32>
    %c0_1 = arith.constant 0 : index
    %c0_2 = arith.constant 0 : index
    %1 = vector.load %arg2[%c0_1, %c0_2] : memref<128x128xf32, #tpu.memory_space<vmem>>, vector<128x128xf32>
    %cst = arith.constant dense<0.000000e+00> : vector<64x128xf32>
    %2 = tpu.matmul %0, %1, %cst {dimension_numbers = #tpu.dot_dimension_numbers<[1], [0], [0], [1], [0, 0, 1, 1], [], []>} : vector<64x128xf32>, vector<128x128xf32>, vector<64x128xf32> -> vector<64x128xf32>
    %c0_3 = arith.constant 0 : index
    %c0_4 = arith.constant 0 : index
    %3 = vector.load %arg3[%c0_3, %c0_4] : memref<64x128xf32, #tpu.memory_space<vmem>>, vector<64x128xf32>
    tpu.vector_store %arg3[%c0_3, %c0_4], %2 {strides = array<i32>} : memref<64x128xf32, #tpu.memory_space<vmem>>, vector<64x128xf32>,
    return
  }
  func.func @transform_0(%arg0: i32) -> (i32, i32) {
    %c0_i32 = arith.constant 0 : i32
    %c0_i32_0 = arith.constant 0 : i32
    return %arg0, %c0_i32 : i32, i32
  }
  func.func @transform_1(%arg0: i32) -> (i32, i32) {
    %c0_i32 = arith.constant 0 : i32
    %c0_i32_0 = arith.constant 0 : i32
    %c0_i32_1 = arith.constant 0 : i32
    return %c0_i32, %c0_i32_0 : i32, i32
  }
  func.func @transform_2(%arg0: i32) -> (i32, i32) {
    %c0_i32 = arith.constant 0 : i32
    %c0_i32_0 = arith.constant 0 : i32
    return %arg0, %c0_i32 : i32, i32
  }
}

</mosaic_0001>

<llo_original>
// kernel: tpu_custom_call.1
$region0: #{tpu_custom_call.1}
  #allocation0 [shape = 'u32[]', space=smem, size = 0x4, offset = 0x4, fixed_abs, tag = 'smem constant byte address 0x4 - core index']
  #allocation1 [shape = 'u32[144,128]{1,0:T(1,128)}', space=vmem, size = 0x12000, scoped, tag = 'internal scratch']
  %s0 = inlined_call_operand.hbm [shape: f32[64,128], index: 0, kind: input, shape index: {}]
  %s1 = inlined_call_operand.hbm [shape: f32[128,128], index: 1, kind: input, shape index: {}]
  %s2 = inlined_call_operand.hbm [shape: f32[64,128], index: 2, kind: output, shape index: {}]
  %s3 = sld [smem:[#allocation0]]
  $region26: #{tpu_custom_call.1} parent=0
    _
  %s5 = ssub.s32 1, %s3
  %s6 = scalar_select 0, %s5, %s3
  $region1: #{tpu_custom_call.1} parent=0
    #allocation2 [shape = 'u8[32768]{0}', space=vmem, size = 0x8000, scoped, tag = 'input window, operand 0, single buffered']
    #allocation3 [shape = 's32[1]{0}', space=sflag, size = 0x4, scoped, tag = 'scoped memory for tpu_custom_call.1']
    #allocation4 [shape = 's32[1]{0}', space=sflag, size = 0x4, scoped, tag = 'scoped memory for tpu_custom_call.1']
    #allocation5 [shape = 'u8[65536]{0}', space=vmem, size = 0x10000, scoped, tag = 'input window, operand 1, single buffered']
    #allocation6 [shape = 's32[1]{0}', space=sflag, size = 0x4, scoped, tag = 'scoped memory for tpu_custom_call.1']
    #allocation7 [shape = 'u8[32768]{0}', space=vmem, size = 0x8000, scoped, tag = 'output window, operand 0, single buffered']
    %7 = vsyncpa [#allocation3], 0
    %8 = vsyncpa [#allocation6], 0
    %9 = vsyncpa [#allocation4], 0
    // Predicated region
    $region2: #{tpu_custom_call.1} parent=1 // pred_check
      _
    $region3: #{tpu_custom_call.1} parent=1 // pred_check_branch
      %11 = sbr.rel (0) target = $region5
    $region4: #{tpu_custom_call.1} parent=1 // pred_region
      %s13 = ssub.s32 1024, 1024
      %14 = vsyncadd [#allocation3], %s13
      %s15 = sshll.u32 [#allocation2], 4
      %s16 = int_to_ptr.vmem [resolvable:$true] %s15
      %21 = dma.hbm_to_vmem [thread:$0]  %s0, 1024, %s16, [#allocation3], 128, 128, 8
    $region5: #{tpu_custom_call.1} parent=1 // pred_fallthru
      _
    // Predicated region
    $region6: #{tpu_custom_call.1} parent=1 // pred_check
      _
    $region7: #{tpu_custom_call.1} parent=1 // pred_check_branch
      %23 = sbr.rel (0) target = $region9
    $region8: #{tpu_custom_call.1} parent=1 // pred_region
      %s25 = ssub.s32 2048, 2048
      %26 = vsyncadd [#allocation6], %s25
      %s27 = sshll.u32 [#allocation5], 4
      %s28 = int_to_ptr.vmem [resolvable:$true] %s27
      %33 = dma.hbm_to_vmem [thread:$0]  %s1, 2048, %s28, [#allocation6], 128, 128, 8
    $region9: #{tpu_custom_call.1} parent=1 // pred_fallthru
      _
    // Predicated region
    $region10: #{tpu_custom_call.1} parent=1 // pred_check
      _
    $region11: #{tpu_custom_call.1} parent=1 // pred_check_branch
      %35 = sbr.rel (0) target = $region13
    $region12: #{tpu_custom_call.1} parent=1 // pred_region
      %36 = dma.done [#allocation3], 1024
    $region13: #{tpu_custom_call.1} parent=1 // pred_fallthru
      _
    // Predicated region
    $region14: #{tpu_custom_call.1} parent=1 // pred_check
      _
    $region15: #{tpu_custom_call.1} parent=1 // pred_check_branch
      %38 = sbr.rel (0) target = $region17
    $region16: #{tpu_custom_call.1} parent=1 // pred_region
      %39 = dma.done [#allocation6], 2048
    $region17: #{tpu_custom_call.1} parent=1 // pred_fallthru
      _
    %v40 = vld [vmem:[#allocation2] sm:$0xff]
    %v41 = vld [vmem:[#allocation2 + $0x8] sm:$0xff]
    %v42 = vld [vmem:[#allocation2 + $0x10] sm:$0xff]
    %v43 = vld [vmem:[#allocation2 + $0x18] sm:$0xff]
    %v44 = vld [vmem:[#allocation2 + $0x20] sm:$0xff]
    %v45 = vld [vmem:[#allocation2 + $0x28] sm:$0xff]
    %v46 = vld [vmem:[#allocation2 + $0x30] sm:$0xff]
    %v47 = vld [vmem:[#allocation2 + $0x38] sm:$0xff]
    %v48 = vld [vmem:[#allocation5] sm:$0xff]
    %v49 = vld [vmem:[#allocation5 + $0x8] sm:$0xff]
    %v50 = vld [vmem:[#allocation5 + $0x10] sm:$0xff]
    %v51 = vld [vmem:[#allocation5 + $0x18] sm:$0xff]
    %v52 = vld [vmem:[#allocation5 + $0x20] sm:$0xff]
    %v53 = vld [vmem:[#allocation5 + $0x28] sm:$0xff]
    %v54 = vld [vmem:[#allocation5 + $0x30] sm:$0xff]
    %v55 = vld [vmem:[#allocation5 + $0x38] sm:$0xff]
    %v56 = vld [vmem:[#allocation5 + $0x40] sm:$0xff]
    %v57 = vld [vmem:[#allocation5 + $0x48] sm:$0xff]
    %v58 = vld [vmem:[#allocation5 + $0x50] sm:$0xff]
    %v59 = vld [vmem:[#allocation5 + $0x58] sm:$0xff]
    %v60 = vld [vmem:[#allocation5 + $0x60] sm:$0xff]
    %v61 = vld [vmem:[#allocation5 + $0x68] sm:$0xff]
    %v62 = vld [vmem:[#allocation5 + $0x70] sm:$0xff]
    %v63 = vld [vmem:[#allocation5 + $0x78] sm:$0xff]
    %64 = vmatprep.subr.mxu0 0.0
    %65 = vmatpush1.msra.mxu0 %v48
    %66 = vmatprep.subr.mxu0 0.0
    %67 = vmatpush1.msra.mxu0 %v49
    %68 = vmatprep.subr.mxu0 0.0
    %69 = vmatpush1.msra.mxu0 %v50
    %70 = vmatprep.subr.mxu0 0.0
    %71 = vmatpush1.msra.mxu0 %v51
    %72 = vmatprep.subr.mxu0 0.0
    %73 = vmatpush1.msra.mxu0 %v52
    %74 = vmatprep.subr.mxu0 0.0
    %75 = vmatpush1.msra.mxu0 %v53
    %76 = vmatprep.subr.mxu0 0.0
    %77 = vmatpush1.msra.mxu0 %v54
    %78 = vmatprep.subr.mxu0 0.0
    %79 = vmatpush1.msra.mxu0 %v55
    %80 = vmatprep.subr.mxu0 0.0
    %81 = vmatpush1.msra.mxu0 %v56
    %82 = vmatprep.subr.mxu0 0.0
    %83 = vmatpush1.msra.mxu0 %v57
    %84 = vmatprep.subr.mxu0 0.0
    %85 = vmatpush1.msra.mxu0 %v58
    %86 = vmatprep.subr.mxu0 0.0
    %87 = vmatpush1.msra.mxu0 %v59
    %88 = vmatprep.subr.mxu0 0.0
    %89 = vmatpush1.msra.mxu0 %v60
    %90 = vmatprep.subr.mxu0 0.0
    %91 = vmatpush1.msra.mxu0 %v61
    %92 = vmatprep.subr.mxu0 0.0
    %93 = vmatpush1.msra.mxu0 %v62
    %94 = vmatprep.subr.mxu0 0.0
    %95 = vmatpush1.msra.mxu0 %v63
    %96 = vmatprep.subr.mxu0 0.0
    %97 = vmatpush1.msra.mxu0 0.0
    %98 = vmatprep.subr.mxu0 0.0
    %99 = vmatpush1.msra.mxu0 0.0
    %100 = vmatprep.subr.mxu0 0.0
    %101 = vmatpush1.msra.mxu0 0.0
    %102 = vmatprep.subr.mxu0 0.0
    %103 = vmatpush1.msra.mxu0 0.0
    %104 = vmatprep.subr.mxu0 0.0
    %105 = vmatpush1.msra.mxu0 0.0
    %106 = vmatprep.subr.mxu0 0.0
    %107 = vmatpush1.msra.mxu0 0.0
    %108 = vmatprep.subr.mxu0 0.0
    %109 = vmatpush1.msra.mxu0 0.0
    %110 = vmatprep.subr.mxu0 0.0
    %111 = vmatpush1.msra.mxu0 0.0
    %112 = vmatprep.subr.mxu0 0.0
    %113 = vmatpush1.msra.mxu0 0.0
    %114 = vmatprep.subr.mxu0 0.0
    %115 = vmatpush1.msra.mxu0 0.0
    %116 = vmatprep.subr.mxu0 0.0
    %117 = vmatpush1.msra.mxu0 0.0
    %118 = vmatprep.subr.mxu0 0.0
    %119 = vmatpush1.msra.mxu0 0.0
    %120 = vmatprep.subr.mxu0 0.0
    %121 = vmatpush1.msra.mxu0 0.0
    %122 = vmatprep.subr.mxu0 0.0
    %123 = vmatpush1.msra.mxu0 0.0
    %124 = vmatprep.subr.mxu0 0.0
    %125 = vmatpush1.msra.mxu0 0.0
    %126 = vmatprep.subr.mxu0 0.0
    %127 = vmatpush1.msra.mxu0 0.0
    %128 = vmatprep.mubr.f32.mxu0 0.0
    %129 = vmatmul.mubr.f32.gmra.mrb[0].mxu0 %v40
    %v130 = vpop.f32.mrb[0].mxu0
    %v131 = vadd.f32 0.0, %v130
    %v132 = vpop.f32.mrb[0].mxu0
    %133 = vmatprep.mubr.f32.mxu0 0.0
    %134 = vmatmul.mubr.f32.gmra.mrb[0].mxu0 %v41
    %v135 = vpop.f32.mrb[0].mxu0
    %v136 = vadd.f32 0.0, %v135
    %v137 = vpop.f32.mrb[0].mxu0
    %138 = vmatprep.mubr.f32.mxu0 0.0
    %139 = vmatmul.mubr.f32.gmra.mrb[0].mxu0 %v42
    %v140 = vpop.f32.mrb[0].mxu0
    %v141 = vadd.f32 0.0, %v140
    %v142 = vpop.f32.mrb[0].mxu0
    %143 = vmatprep.mubr.f32.mxu0 0.0
    %144 = vmatmul.mubr.f32.gmra.mrb[0].mxu0 %v43
    %v145 = vpop.f32.mrb[0].mxu0
    %v146 = vadd.f32 0.0, %v145
    %v147 = vpop.f32.mrb[0].mxu0
    %148 = vmatprep.mubr.f32.mxu0 0.0
    %149 = vmatmul.mubr.f32.gmra.mrb[0].mxu0 %v44
    %v150 = vpop.f32.mrb[0].mxu0
    %v151 = vadd.f32 0.0, %v150
    %v152 = vpop.f32.mrb[0].mxu0
    %153 = vmatprep.mubr.f32.mxu0 0.0
    %154 = vmatmul.mubr.f32.gmra.mrb[0].mxu0 %v45
    %v155 = vpop.f32.mrb[0].mxu0
    %v156 = vadd.f32 0.0, %v155
    %v157 = vpop.f32.mrb[0].mxu0
    %158 = vmatprep.mubr.f32.mxu0 0.0
    %159 = vmatmul.mubr.f32.gmra.mrb[0].mxu0 %v46
    %v160 = vpop.f32.mrb[0].mxu0
    %v161 = vadd.f32 0.0, %v160
    %v162 = vpop.f32.mrb[0].mxu0
    %163 = vmatprep.mubr.f32.mxu0 0.0
    %164 = vmatmul.mubr.f32.gmra.mrb[0].mxu0 %v47
    %v165 = vpop.f32.mrb[0].mxu0
    %v166 = vadd.f32 0.0, %v165
    %v167 = vpop.f32.mrb[0].mxu0
    %168 = vdwg.mxu0
    %169 = vst [vmem:[#allocation7] sm:$0xff] %v131
    %170 = vst [vmem:[#allocation7 + $0x8] sm:$0xff] %v136
    %171 = vst [vmem:[#allocation7 + $0x10] sm:$0xff] %v141
    %172 = vst [vmem:[#allocation7 + $0x18] sm:$0xff] %v146
    %173 = vst [vmem:[#allocation7 + $0x20] sm:$0xff] %v151
    %174 = vst [vmem:[#allocation7 + $0x28] sm:$0xff] %v156
    %175 = vst [vmem:[#allocation7 + $0x30] sm:$0xff] %v161
    %176 = vst [vmem:[#allocation7 + $0x38] sm:$0xff] %v166
    // Predicated region
    $region18: #{tpu_custom_call.1} parent=1 // pred_check
      _
    $region19: #{tpu_custom_call.1} parent=1 // pred_check_branch
      %178 = sbr.rel (0) target = $region21
    $region20: #{tpu_custom_call.1} parent=1 // pred_region
      %s180 = ssub.s32 1024, 1024
      %181 = vsyncadd [#allocation4], %s180
      %s182 = sshll.u32 [#allocation7], 4
      %s183 = int_to_ptr.vmem [resolvable:$true] %s182
      %188 = dma.vmem_to_hbm [thread:$0]  %s183, 1024, %s2, [#allocation4], 128, 128, 8
    $region21: #{tpu_custom_call.1} parent=1 // pred_fallthru
      _
    // Predicated region
    $region22: #{tpu_custom_call.1} parent=1 // pred_check
      _
    $region23: #{tpu_custom_call.1} parent=1 // pred_check_branch
      %190 = sbr.rel (0) target = $region25
    $region24: #{tpu_custom_call.1} parent=1 // pred_region
      %191 = dma.done [#allocation4], 1024
    $region25: #{tpu_custom_call.1} parent=1 // pred_fallthru
      _
    %192 = vsyncpa [#allocation3], 1
    %193 = vsyncpa [#allocation6], 1
    %194 = vsyncpa [#allocation4], 1

</llo_original>
